<compile_context>
chip_gen: v5e
topology: v5e:2x2
jax: 0.10.0
libtpu: 0.0.40
codegen_flags: <defaults>
</compile_context>

<pallas_src>
import jax
import jax.numpy as jnp
from jax.experimental import pallas as pl
from jax.experimental.pallas import tpu as pltpu


HIDDEN = 128                              # fixed by the module definition
_VMEM_SOFT_BUDGET = 40 * 1024 * 1024      # keep tiles + buffers under this
_VMEM_LIMIT = 48 * 1024 * 1024            # scoped limit (< v7x 64 MiB physical)


def _round_up(x, m):
    return ((x + m - 1) // m) * m


def _qnet_kernel(x_ref, w1_ref, b1_ref, w2_ref, b2_ref, w3_ref, b3_ref, o_ref):
    # One (TM, input_dim) batch tile per grid step; weights/biases are
    # VMEM-resident across the whole grid (their block index never changes).
    # x arrives in its native dtype (f32) and is cast to the weight compute
    # dtype here -- a VPU cast hidden under the DMA, not an extra HBM pass.
    x = x_ref[...].astype(w1_ref.dtype)
    h1 = jnp.dot(x, w1_ref[...], preferred_element_type=jnp.float32) + b1_ref[...]
    h1 = jnp.maximum(h1, 0.0)
    h2 = jnp.dot(h1.astype(w2_ref.dtype), w2_ref[...],
                 preferred_element_type=jnp.float32) + b2_ref[...]
    h2 = jnp.maximum(h2, 0.0)
    out = jnp.dot(h2.astype(w3_ref.dtype), w3_ref[...],
                  preferred_element_type=jnp.float32) + b3_ref[...]
    o_ref[...] = out.astype(o_ref.dtype)


def prepare_params(params, *, use_bf16=True):
    """One-time param prep: weights in compute dtype, biases as (1, H) f32.

    Do this once (e.g. after each optimizer step), not per forward call.
    """
    cd = jnp.bfloat16 if use_bf16 else jnp.float32
    return {
        "w1": params["w1"].astype(cd),
        "w2": params["w2"].astype(cd),
        "w3": params["w3"].astype(cd),
        "b1": params["b1"].reshape(1, -1).astype(jnp.float32),
        "b2": params["b2"].reshape(1, -1).astype(jnp.float32),
        "b3": params["b3"].reshape(1, -1).astype(jnp.float32),
    }


def qnetwork_forward(state, params, *, tile_m=1024):
    """Forward pass of QNetwork (expects `prepare_params` output).

    state : any shape whose trailing dims multiply to input_dim (leading dims
            collapse into the batch), mirroring `state.view(-1, input_dim)`.
    """
    w1, b1 = params["w1"], params["b1"]
    w2, b2 = params["w2"], params["b2"]
    w3, b3 = params["w3"], params["b3"]
    input_dim, hidden = w1.shape
    n_actions = w3.shape[1]

    x = state.reshape(-1, input_dim)
    if x.dtype not in (jnp.float32, jnp.bfloat16):
        x = x.astype(jnp.float32)
    batch = x.shape[0]

    # Batch tile: multiple of 8 sublanes; cap so the grid has >=2 steps when
    # the batch allows it (lets "parallel" shard across both v7x TensorCores).
    tile_m = max(8, _round_up(tile_m, 8))
    tm = min(tile_m, _round_up(max(pl.cdiv(batch, 2), 1), 8))

    # VMEM accounting (sized for v7x's 64 MiB physical VMEM).
    x_bytes = jnp.dtype(x.dtype).itemsize
    w_bytes = jnp.dtype(w1.dtype).itemsize
    weight_bytes = (input_dim * hidden + hidden * hidden + hidden * n_actions) * w_bytes
    bias_bytes = (2 * hidden + n_actions) * 4

    def _vmem_need(tm_):
        return (2 * tm_ * input_dim * x_bytes        # x tile, double-buffered
                + 2 * tm_ * n_actions * 4            # out tile, double-buffered
                + 2 * (weight_bytes + bias_bytes)    # resident weights/biases
                + 2 * tm_ * hidden * 4               # h1/h2 intermediates
                + (2 << 20))                         # slack

    while _vmem_need(tm) > _VMEM_SOFT_BUDGET and tm > 8:
        tm = max(8, _round_up(tm // 2, 8))

    grid = (pl.cdiv(batch, tm),)

    flops = 2 * batch * (input_dim * hidden + hidden * hidden + hidden * n_actions)
    bytes_accessed = (batch * input_dim * x_bytes     # x read
                      + weight_bytes + bias_bytes     # weights (resident, read once)
                      + batch * n_actions * 4)        # output write

    resident = lambda i: (0, 0)

    return pl.pallas_call(
        _qnet_kernel,
        out_shape=jax.ShapeDtypeStruct((batch, n_actions), jnp.float32),
        grid=grid,
        in_specs=[
            pl.BlockSpec((tm, input_dim), lambda i: (i, 0)),    # x: tiled over batch
            pl.BlockSpec((input_dim, hidden), resident),        # w1 (resident)
            pl.BlockSpec((1, hidden), resident),                # b1
            pl.BlockSpec((hidden, hidden), resident),           # w2
            pl.BlockSpec((1, hidden), resident),                # b2
            pl.BlockSpec((hidden, n_actions), resident),        # w3 (unpadded)
            pl.BlockSpec((1, n_actions), resident),             # b3
        ],
        out_specs=pl.BlockSpec((tm, n_actions), lambda i: (i, 0)),
        compiler_params=pltpu.CompilerParams(
            dimension_semantics=("parallel",),
            vmem_limit_bytes=_VMEM_LIMIT),
        cost_estimate=pl.CostEstimate(
            flops=int(flops), transcendentals=0,
            bytes_accessed=int(bytes_accessed)),
    )(x, w1, b1, w2, b2, w3, b3)


def init_params(states_dim, n_actions, key):
    """Deterministic param init matching nn.Linear shapes (stored as (in, out))."""
    input_dim = 1
    for d in states_dim:
        input_dim *= d
    k1, k2, k3, k4, k5, k6 = jax.random.split(key, 6)

    def lin_init(kw, kb, fan_in, fan_out):
        bound = 1.0 / jnp.sqrt(jnp.float32(fan_in))
        w = jax.random.uniform(kw, (fan_in, fan_out), jnp.float32, -bound, bound)
        b = jax.random.uniform(kb, (fan_out,), jnp.float32, -bound, bound)
        return w, b

    w1, b1 = lin_init(k1, k2, input_dim, HIDDEN)
    w2, b2 = lin_init(k3, k4, HIDDEN, HIDDEN)
    w3, b3 = lin_init(k5, k6, HIDDEN, n_actions)
    return {"w1": w1, "b1": b1, "w2": w2, "b2": b2, "w3": w3, "b3": b3}


def _ref_forward(state, raw_params, *, use_bf16=True):
    """Pure-JAX reference mirroring the kernel's precision (bf16 in / f32 acc)."""
    input_dim = raw_params["w1"].shape[0]
    cd = jnp.bfloat16 if use_bf16 else jnp.float32
    x = state.reshape(-1, input_dim).astype(jnp.float32)

    def lin(a, w, b):
        return jnp.dot(a.astype(cd), w.astype(cd),
                       preferred_element_type=jnp.float32) + b

    h1 = jnp.maximum(lin(x, raw_params["w1"], raw_params["b1"]), 0.0)
    h2 = jnp.maximum(lin(h1, raw_params["w2"], raw_params["b2"]), 0.0)
    return lin(h2, raw_params["w3"], raw_params["b3"])


if __name__ == "__main__":
    key = jax.random.PRNGKey(0)
    states_dim = (4, 16, 16)   # input_dim = 1024
    n_actions = 8
    batch = 2

    pkey, xkey, xkey2 = jax.random.split(key, 3)
    raw_params = init_params(states_dim, n_actions, pkey)
    params_bf16 = prepare_params(raw_params, use_bf16=True)
    params_f32 = prepare_params(raw_params, use_bf16=False)

    # Small demo batch (single partial tile), bf16 compute path.
    state = jax.random.normal(xkey, (batch,) + states_dim, dtype=jnp.float32)
    q_values = qnetwork_forward(state, params_bf16)
    jax.block_until_ready(q_values)
    assert q_values.shape == (batch, n_actions)
    ref = _ref_forward(state, raw_params, use_bf16=True)
    assert jnp.allclose(q_values, ref, atol=1e-2, rtol=1e-2)

    # f32 path: parity check against the original (f32) module's precision.
    q32 = qnetwork_forward(state, params_f32)
    jax.block_until_ready(q32)
    ref32 = _ref_forward(state, raw_params, use_bf16=False)
    assert jnp.allclose(q32, ref32, atol=1e-2, rtol=1e-2)

    # Larger batch: multi-step grid (>=2 steps) with a partial trailing tile.
    big_batch = 1000
    state_big = jax.random.normal(xkey2, (big_batch,) + states_dim, dtype=jnp.float32)
    q_big = qnetwork_forward(state_big, params_bf16)
    jax.block_until_ready(q_big)
    assert q_big.shape == (big_batch, n_actions)
    ref_big = _ref_forward(state_big, raw_params, use_bf16=True)
    assert jnp.allclose(q_big, ref_big, atol=1e-2, rtol=1e-2)

    print("KERNEL_OK")
</pallas_src>

<mosaic_0001>
module attributes {stable_mosaic.version = 11 : i64} {
  func.func @_qnet_kernel(%arg0: i32, %arg1: memref<8x1024xf32, #tpu.memory_space<vmem>>, %arg2: memref<1024x128xbf16, #tpu.memory_space<vmem>>, %arg3: memref<1x128xf32, #tpu.memory_space<vmem>>, %arg4: memref<128x128xbf16, #tpu.memory_space<vmem>>, %arg5: memref<1x128xf32, #tpu.memory_space<vmem>>, %arg6: memref<128x8xbf16, #tpu.memory_space<vmem>>, %arg7: memref<1x8xf32, #tpu.memory_space<vmem>>, %arg8: memref<8x8xf32, #tpu.memory_space<vmem>>) attributes {dimension_semantics = [#tpu.dimension_semantics<parallel>], iteration_bounds = array<i64: 1>, scalar_prefetch = 0 : i64, scratch_operands = 0 : i64, tpu.core_type = #tpu.core_type<tc>, window_params = [{transform_indices = @transform_0, window_bounds = array<i64: 8, 1024>}, {pipeline_mode = #tpu.pipeline_mode<synchronous>, transform_indices = @transform_1, window_bounds = array<i64: 1024, 128>}, {pipeline_mode = #tpu.pipeline_mode<synchronous>, transform_indices = @transform_2, window_bounds = array<i64: 1, 128>}, {pipeline_mode = #tpu.pipeline_mode<synchronous>, transform_indices = @transform_3, window_bounds = array<i64: 128, 128>}, {pipeline_mode = #tpu.pipeline_mode<synchronous>, transform_indices = @transform_4, window_bounds = array<i64: 1, 128>}, {pipeline_mode = #tpu.pipeline_mode<synchronous>, transform_indices = @transform_5, window_bounds = array<i64: 128, 8>}, {pipeline_mode = #tpu.pipeline_mode<synchronous>, transform_indices = @transform_6, window_bounds = array<i64: 1, 8>}, {transform_indices = @transform_7, window_bounds = array<i64: 8, 8>}]} {
    %c0 = arith.constant 0 : index
    %c0_0 = arith.constant 0 : index
    %0 = vector.load %arg1[%c0, %c0_0] : memref<8x1024xf32, #tpu.memory_space<vmem>>, vector<8x1024xf32>
    %1 = arith.truncf %0 : vector<8x1024xf32> to vector<8x1024xbf16>
    %c0_1 = arith.constant 0 : index
    %c0_2 = arith.constant 0 : index
    %2 = vector.load %arg2[%c0_1, %c0_2] : memref<1024x128xbf16, #tpu.memory_space<vmem>>, vector<1024x128xbf16>
    %cst = arith.constant dense<0.000000e+00> : vector<8x128xf32>
    %3 = tpu.matmul %1, %2, %cst {dimension_numbers = #tpu.dot_dimension_numbers<[1], [0], [0], [1], [0, 0, 1, 1], [], []>} : vector<8x1024xbf16>, vector<1024x128xbf16>, vector<8x128xf32> -> vector<8x128xf32>
    %c0_3 = arith.constant 0 : index
    %c0_4 = arith.constant 0 : index
    %4 = vector.load %arg3[%c0_3, %c0_4] : memref<1x128xf32, #tpu.memory_space<vmem>>, vector<1x128xf32>
    %5 = vector.broadcast %4 : vector<1x128xf32> to vector<8x128xf32>
    %6 = arith.addf %3, %5 : vector<8x128xf32>
    %cst_5 = arith.constant 0.000000e+00 : f32
    %7 = vector.broadcast %cst_5 : f32 to vector<8x128xf32>
    %8 = arith.maximumf %6, %7 : vector<8x128xf32>
    %9 = arith.truncf %8 : vector<8x128xf32> to vector<8x128xbf16>
    %c0_6 = arith.constant 0 : index
    %c0_7 = arith.constant 0 : index
    %10 = vector.load %arg4[%c0_6, %c0_7] : memref<128x128xbf16, #tpu.memory_space<vmem>>, vector<128x128xbf16>
    %cst_8 = arith.constant dense<0.000000e+00> : vector<8x128xf32>
    %11 = tpu.matmul %9, %10, %cst_8 {dimension_numbers = #tpu.dot_dimension_numbers<[1], [0], [0], [1], [0, 0, 1, 1], [], []>} : vector<8x128xbf16>, vector<128x128xbf16>, vector<8x128xf32> -> vector<8x128xf32>
    %c0_9 = arith.constant 0 : index
    %c0_10 = arith.constant 0 : index
    %12 = vector.load %arg5[%c0_9, %c0_10] : memref<1x128xf32, #tpu.memory_space<vmem>>, vector<1x128xf32>
    %13 = vector.broadcast %12 : vector<1x128xf32> to vector<8x128xf32>
    %14 = arith.addf %11, %13 : vector<8x128xf32>
    %cst_11 = arith.constant 0.000000e+00 : f32
    %15 = vector.broadcast %cst_11 : f32 to vector<8x128xf32>
    %16 = arith.maximumf %14, %15 : vector<8x128xf32>
    %17 = arith.truncf %16 : vector<8x128xf32> to vector<8x128xbf16>
    %c0_12 = arith.constant 0 : index
    %c0_13 = arith.constant 0 : index
    %18 = vector.load %arg6[%c0_12, %c0_13] : memref<128x8xbf16, #tpu.memory_space<vmem>>, vector<128x8xbf16>
    %cst_14 = arith.constant dense<0.000000e+00> : vector<8x8xf32>
    %19 = tpu.matmul %17, %18, %cst_14 {dimension_numbers = #tpu.dot_dimension_numbers<[1], [0], [0], [1], [0, 0, 1, 1], [], []>} : vector<8x128xbf16>, vector<128x8xbf16>, vector<8x8xf32> -> vector<8x8xf32>
    %c0_15 = arith.constant 0 : index
    %c0_16 = arith.constant 0 : index
    %20 = vector.load %arg7[%c0_15, %c0_16] : memref<1x8xf32, #tpu.memory_space<vmem>>, vector<1x8xf32>
    %21 = vector.broadcast %20 : vector<1x8xf32> to vector<8x8xf32>
    %22 = arith.addf %19, %21 : vector<8x8xf32>
    %c0_17 = arith.constant 0 : index
    %c0_18 = arith.constant 0 : index
    %23 = vector.load %arg8[%c0_17, %c0_18] : memref<8x8xf32, #tpu.memory_space<vmem>>, vector<8x8xf32>
    tpu.vector_store %arg8[%c0_17, %c0_18], %22 {strides = array<i32>} : memref<8x8xf32, #tpu.memory_space<vmem>>, vector<8x8xf32>,
    return
  }
  func.func @transform_0(%arg0: i32) -> (i32, i32) {
    %c0_i32 = arith.constant 0 : i32
    %c0_i32_0 = arith.constant 0 : i32
    return %arg0, %c0_i32 : i32, i32
  }
  func.func @transform_1(%arg0: i32) -> (i32, i32) {
    %c0_i32 = arith.constant 0 : i32
    %c0_i32_0 = arith.constant 0 : i32
    %c0_i32_1 = arith.constant 0 : i32
    return %c0_i32, %c0_i32_0 : i32, i32
  }
  func.func @transform_2(%arg0: i32) -> (i32, i32) {
    %c0_i32 = arith.constant 0 : i32
    %c0_i32_0 = arith.constant 0 : i32
    %c0_i32_1 = arith.constant 0 : i32
    return %c0_i32, %c0_i32_0 : i32, i32
  }
  func.func @transform_3(%arg0: i32) -> (i32, i32) {
    %c0_i32 = arith.constant 0 : i32
    %c0_i32_0 = arith.constant 0 : i32
    %c0_i32_1 = arith.constant 0 : i32
    return %c0_i32, %c0_i32_0 : i32, i32
  }
  func.func @transform_4(%arg0: i32) -> (i32, i32) {
    %c0_i32 = arith.constant 0 : i32
    %c0_i32_0 = arith.constant 0 : i32
    %c0_i32_1 = arith.constant 0 : i32
    return %c0_i32, %c0_i32_0 : i32, i32
  }
  func.func @transform_5(%arg0: i32) -> (i32, i32) {
    %c0_i32 = arith.constant 0 : i32
    %c0_i32_0 = arith.constant 0 : i32
    %c0_i32_1 = arith.constant 0 : i32
    return %c0_i32, %c0_i32_0 : i32, i32
  }
  func.func @transform_6(%arg0: i32) -> (i32, i32) {
    %c0_i32 = arith.constant 0 : i32
    %c0_i32_0 = arith.constant 0 : i32
    %c0_i32_1 = arith.constant 0 : i32
    return %c0_i32, %c0_i32_0 : i32, i32
  }
  func.func @transform_7(%arg0: i32) -> (i32, i32) {
    %c0_i32 = arith.constant 0 : i32
    %c0_i32_0 = arith.constant 0 : i32
    return %arg0, %c0_i32 : i32, i32
  }
}

</mosaic_0001>

<llo_original>
// kernel: tpu_custom_call.1
$region0: #{tpu_custom_call.1}
  #allocation0 [shape = 'u32[]', space=smem, size = 0x4, offset = 0x4, fixed_abs, tag = 'smem constant byte address 0x4 - core index']
  #allocation1 [shape = 'u32[72,128]{1,0:T(1,128)}', space=vmem, size = 0x9000, scoped, tag = 'internal scratch']
  %s0 = inlined_call_operand.hbm [shape: f32[2,1024], index: 0, kind: input, shape index: {}]
  %s1 = inlined_call_operand.hbm [shape: bf16[1024,128], index: 1, kind: input, shape index: {}]
  %s2 = inlined_call_operand.vmem [shape: f32[1,128], index: 2, kind: input, shape index: {}]
  %s3 = inlined_call_operand.vmem [shape: bf16[128,128], index: 3, kind: input, shape index: {}]
  %s4 = inlined_call_operand.vmem [shape: f32[1,128], index: 4, kind: input, shape index: {}]
  %s5 = inlined_call_operand.vmem [shape: bf16[128,8], index: 5, kind: input, shape index: {}]
  %s6 = inlined_call_operand.vmem [shape: f32[1,8], index: 6, kind: input, shape index: {}]
  %s7 = inlined_call_operand.hbm [shape: f32[2,8], index: 7, kind: output, shape index: {}]
  %s8 = sld [smem:[#allocation0]]
  $region46: #{tpu_custom_call.1} parent=0
    _
  %s10 = ssub.s32 1, %s8
  %s11 = scalar_select 0, %s10, %s8
  $region1: #{tpu_custom_call.1} parent=0
    #allocation2 [shape = 'u8[32768]{0}', space=vmem, size = 0x8000, scoped, tag = 'input window, operand 0, single buffered']
    #allocation3 [shape = 's32[1]{0}', space=sflag, size = 0x4, scoped, tag = 'scoped memory for tpu_custom_call.1']
    #allocation4 [shape = 's32[1]{0}', space=sflag, size = 0x4, scoped, tag = 'scoped memory for tpu_custom_call.1']
    #allocation5 [shape = 'u8[262144]{0}', space=vmem, size = 0x40000, scoped, tag = 'input window, operand 1, single buffered']
    #allocation6 [shape = 's32[1]{0}', space=sflag, size = 0x4, scoped, tag = 'scoped memory for tpu_custom_call.1']
    #allocation7 [shape = 'u8[4096]{0}', space=vmem, size = 0x1000, scoped, tag = 'output window, operand 0, single buffered']
    %12 = vsyncpa [#allocation3], 0
    %13 = vsyncpa [#allocation6], 0
    %14 = vsyncpa [#allocation4], 0
    // Predicated region
    $region2: #{tpu_custom_call.1} parent=1 // pred_check
      _
    $region3: #{tpu_custom_call.1} parent=1 // pred_check_branch
      %16 = sbr.rel (0) target = $region5
    $region4: #{tpu_custom_call.1} parent=1 // pred_region
      %18 = vsyncadd [#allocation3], 768
      %s19 = sshll.u32 %s0, 4
      %s20 = int_to_ptr.hbm [resolvable:$true] %s19
      %s21 = sshll.u32 [#allocation2], 4
      %s22 = int_to_ptr.vmem [resolvable:$true] %s21
      %27 = dma.hbm_to_vmem [thread:$0]  %s20, 256, %s22, [#allocation3], 256, 256, 16
    $region5: #{tpu_custom_call.1} parent=1 // pred_fallthru
      _
    // Predicated region
    $region6: #{tpu_custom_call.1} parent=1 // pred_check
      _
    $region7: #{tpu_custom_call.1} parent=1 // pred_check_branch
      %29 = sbr.rel (0) target = $region9
    $region8: #{tpu_custom_call.1} parent=1 // pred_region
      %31 = vsyncadd [#allocation6], 0
      %s32 = sshll.u32 %s1, 4
      %s33 = int_to_ptr.hbm [resolvable:$true] %s32
      %s34 = sshll.u32 [#allocation5], 4
      %s35 = int_to_ptr.vmem [resolvable:$true] %s34
      %40 = dma.hbm_to_vmem [thread:$0]  %s33, 8192, %s35, [#allocation6], 64, 64, 4
    $region9: #{tpu_custom_call.1} parent=1 // pred_fallthru
      _
    // Predicated region
    $region10: #{tpu_custom_call.1} parent=1 // pred_check
      _
    $region11: #{tpu_custom_call.1} parent=1 // pred_check_branch
      %42 = sbr.rel (0) target = $region13
    $region12: #{tpu_custom_call.1} parent=1 // pred_region
      _
    $region13: #{tpu_custom_call.1} parent=1 // pred_fallthru
      _
    // Predicated region
    $region14: #{tpu_custom_call.1} parent=1 // pred_check
      _
    $region15: #{tpu_custom_call.1} parent=1 // pred_check_branch
      %44 = sbr.rel (0) target = $region17
    $region16: #{tpu_custom_call.1} parent=1 // pred_region
      _
    $region17: #{tpu_custom_call.1} parent=1 // pred_fallthru
      _
    // Predicated region
    $region18: #{tpu_custom_call.1} parent=1 // pred_check
      _
    $region19: #{tpu_custom_call.1} parent=1 // pred_check_branch
      %46 = sbr.rel (0) target = $region21
    $region20: #{tpu_custom_call.1} parent=1 // pred_region
      _
    $region21: #{tpu_custom_call.1} parent=1 // pred_fallthru
      _
    // Predicated region
    $region22: #{tpu_custom_call.1} parent=1 // pred_check
      _
    $region23: #{tpu_custom_call.1} parent=1 // pred_check_branch
      %48 = sbr.rel (0) target = $region25
    $region24: #{tpu_custom_call.1} parent=1 // pred_region
      _
    $region25: #{tpu_custom_call.1} parent=1 // pred_fallthru
      _
    // Predicated region
    $region26: #{tpu_custom_call.1} parent=1 // pred_check
      _
    $region27: #{tpu_custom_call.1} parent=1 // pred_check_branch
      %50 = sbr.rel (0) target = $region29
    $region28: #{tpu_custom_call.1} parent=1 // pred_region
      _
    $region29: #{tpu_custom_call.1} parent=1 // pred_fallthru
      _
    // Predicated region
    $region30: #{tpu_custom_call.1} parent=1 // pred_check
      _
    $region31: #{tpu_custom_call.1} parent=1 // pred_check_branch
      %52 = sbr.rel (0) target = $region33
    $region32: #{tpu_custom_call.1} parent=1 // pred_region
      %54 = dma.done [#allocation3], 1024
    $region33: #{tpu_custom_call.1} parent=1 // pred_fallthru
      _
    // Predicated region
    $region34: #{tpu_custom_call.1} parent=1 // pred_check
      _
    $region35: #{tpu_custom_call.1} parent=1 // pred_check_branch
      %56 = sbr.rel (0) target = $region37
    $region36: #{tpu_custom_call.1} parent=1 // pred_region
      %58 = dma.done [#allocation6], 8192
    $region37: #{tpu_custom_call.1} parent=1 // pred_fallthru
      _
    %v59 = vld [vmem:[#allocation2] sm:$0xff]
    %v60 = vld [vmem:[#allocation2 + $0x8] sm:$0xff]
    %v61 = vld [vmem:[#allocation2 + $0x10] sm:$0xff]
    %v62 = vld [vmem:[#allocation2 + $0x18] sm:$0xff]
    %v63 = vld [vmem:[#allocation2 + $0x20] sm:$0xff]
    %v64 = vld [vmem:[#allocation2 + $0x28] sm:$0xff]
    %v65 = vld [vmem:[#allocation2 + $0x30] sm:$0xff]
    %v66 = vld [vmem:[#allocation2 + $0x38] sm:$0xff]
    %75 = vst [vmem:[#allocation1] ss:$4 sm:$0xff] %v59
    %s76 = scalar_lea.vmem [#allocation1], 1
    %77 = vst [vmem:[%s76] ss:$4 sm:$0xff] %v61
    %s78 = scalar_lea.vmem [#allocation1], 2
    %79 = vst [vmem:[%s78] ss:$4 sm:$0xff] %v63
    %s80 = scalar_lea.vmem [#allocation1], 3
    %81 = vst [vmem:[%s80] ss:$4 sm:$0xff] %v65
    %s82 = scalar_lea.vmem [#allocation1], 32
    %83 = vst [vmem:[%s82] ss:$4 sm:$0xff] %v60
    %s84 = scalar_lea.vmem [#allocation1], 33
    %85 = vst [vmem:[%s84] ss:$4 sm:$0xff] %v62
    %s86 = scalar_lea.vmem [#allocation1], 34
    %87 = vst [vmem:[%s86] ss:$4 sm:$0xff] %v64
    %s88 = scalar_lea.vmem [#allocation1], 35
    %89 = vst [vmem:[%s88] ss:$4 sm:$0xff] %v66
    %v90 = vld.sshfl [vmem:[#allocation1] sm:$0xff pattern:$0x73625140]
    %v91 = vld.sshfl [vmem:[#allocation1 + $0x8] sm:$0xff pattern:$0x73625140]
    %v92 = vld.sshfl [vmem:[#allocation1 + $0x10] sm:$0xff pattern:$0x73625140]
    %v93 = vld.sshfl [vmem:[#allocation1 + $0x18] sm:$0xff pattern:$0x73625140]
    %v94 = vld.sshfl [vmem:[#allocation1 + $0x20] sm:$0xff pattern:$0x73625140]
    %v95 = vld.sshfl [vmem:[#allocation1 + $0x28] sm:$0xff pattern:$0x73625140]
    %v96 = vld.sshfl [vmem:[#allocation1 + $0x30] sm:$0xff pattern:$0x73625140]
    %v97 = vld.sshfl [vmem:[#allocation1 + $0x38] sm:$0xff pattern:$0x73625140]
    %v106 = vpack.c.bf16 %v90, %v90
    %v107 = vpack.c.bf16 %v91, %v91
    %v108 = vpack.c.bf16 %v92, %v92
    %v109 = vpack.c.bf16 %v93, %v93
    %v110 = vpack.c.bf16 %v94, %v94
    %v111 = vpack.c.bf16 %v95, %v95
    %v112 = vpack.c.bf16 %v96, %v96
    %v113 = vpack.c.bf16 %v97, %v97
    %v114 = vld [vmem:[#allocation5] sm:$0xf]
    %v115 = vld [vmem:[#allocation5 + $0x4] sm:$0xf]
    %v116 = vld [vmem:[#allocation5 + $0x8] sm:$0xf]
    %v117 = vld [vmem:[#allocation5 + $0xc] sm:$0xf]
    %v118 = vld [vmem:[#allocation5 + $0x10] sm:$0xf]
    %v119 = vld [vmem:[#allocation5 + $0x14] sm:$0xf]
    %v120 = vld [vmem:[#allocation5 + $0x18] sm:$0xf]
    %v121 = vld [vmem:[#allocation5 + $0x1c] sm:$0xf]
    %v122 = vld [vmem:[#allocation5 + $0x20] sm:$0xf]
    %v123 = vld [vmem:[#allocation5 + $0x24] sm:$0xf]
    %v124 = vld [vmem:[#allocation5 + $0x28] sm:$0xf]
    %v125 = vld [vmem:[#allocation5 + $0x2c] sm:$0xf]
    %v126 = vld [vmem:[#allocation5 + $0x30] sm:$0xf]
    %v127 = vld [vmem:[#allocation5 + $0x34] sm:$0xf]
    %v128 = vld [vmem:[#allocation5 + $0x38] sm:$0xf]
    %v129 = vld [vmem:[#allocation5 + $0x3c] sm:$0xf]
    %v130 = vld [vmem:[#allocation5 + $0x40] sm:$0xf]
    %v131 = vld [vmem:[#allocation5 + $0x44] sm:$0xf]
    %v132 = vld [vmem:[#allocation5 + $0x48] sm:$0xf]
    %v133 = vld [vmem:[#allocation5 + $0x4c] sm:$0xf]
    %v134 = vld [vmem:[#allocation5 + $0x50] sm:$0xf]
    %v135 = vld [vmem:[#allocation5 + $0x54] sm:$0xf]
    %v136 = vld [vmem:[#allocation5 + $0x58] sm:$0xf]
    %v137 = vld [vmem:[#allocation5 + $0x5c] sm:$0xf]
    %v138 = vld [vmem:[#allocation5 + $0x60] sm:$0xf]
    %v139 = vld [vmem:[#allocation5 + $0x64] sm:$0xf]
    %v140 = vld [vmem:[#allocation5 + $0x68] sm:$0xf]
    %v141 = vld [vmem:[#allocation5 + $0x6c] sm:$0xf]
    %v142 = vld [vmem:[#allocation5 + $0x70] sm:$0xf]
    %v143 = vld [vmem:[#allocation5 + $0x74] sm:$0xf]
    %v144 = vld [vmem:[#allocation5 + $0x78] sm:$0xf]
    %v145 = vld [vmem:[#allocation5 + $0x7c] sm:$0xf]
    %v146 = vld [vmem:[#allocation5 + $0x80] sm:$0xf]
    %v147 = vld [vmem:[#allocation5 + $0x84] sm:$0xf]
    %v148 = vld [vmem:[#allocation5 + $0x88] sm:$0xf]
    %v149 = vld [vmem:[#allocation5 + $0x8c] sm:$0xf]
    %v150 = vld [vmem:[#allocation5 + $0x90] sm:$0xf]
    %v151 = vld [vmem:[#allocation5 + $0x94] sm:$0xf]
    %v152 = vld [vmem:[#allocation5 + $0x98] sm:$0xf]
    %v153 = vld [vmem:[#allocation5 + $0x9c] sm:$0xf]
    %v154 = vld [vmem:[#allocation5 + $0xa0] sm:$0xf]
    %v155 = vld [vmem:[#allocation5 + $0xa4] sm:$0xf]
    %v156 = vld [vmem:[#allocation5 + $0xa8] sm:$0xf]
    %v157 = vld [vmem:[#allocation5 + $0xac] sm:$0xf]
    %v158 = vld [vmem:[#allocation5 + $0xb0] sm:$0xf]
    %v159 = vld [vmem:[#allocation5 + $0xb4] sm:$0xf]
    %v160 = vld [vmem:[#allocation5 + $0xb8] sm:$0xf]
    %v161 = vld [vmem:[#allocation5 + $0xbc] sm:$0xf]
    %v162 = vld [vmem:[#allocation5 + $0xc0] sm:$0xf]
    %v163 = vld [vmem:[#allocation5 + $0xc4] sm:$0xf]
    %v164 = vld [vmem:[#allocation5 + $0xc8] sm:$0xf]
    %v165 = vld [vmem:[#allocation5 + $0xcc] sm:$0xf]
    %v166 = vld [vmem:[#allocation5 + $0xd0] sm:$0xf]
    %v167 = vld [vmem:[#allocation5 + $0xd4] sm:$0xf]
    %v168 = vld [vmem:[#allocation5 + $0xd8] sm:$0xf]
    %v169 = vld [vmem:[#allocation5 + $0xdc] sm:$0xf]
    %v170 = vld [vmem:[#allocation5 + $0xe0] sm:$0xf]
    %v171 = vld [vmem:[#allocation5 + $0xe4] sm:$0xf]
    %v172 = vld [vmem:[#allocation5 + $0xe8] sm:$0xf]
    %v173 = vld [vmem:[#allocation5 + $0xec] sm:$0xf]
    %v174 = vld [vmem:[#allocation5 + $0xf0] sm:$0xf]
    %v175 = vld [vmem:[#allocation5 + $0xf4] sm:$0xf]
    %v176 = vld [vmem:[#allocation5 + $0xf8] sm:$0xf]
    %v177 = vld [vmem:[#allocation5 + $0xfc] sm:$0xf]
    %v178 = vld [vmem:[#allocation5 + $0x100] sm:$0xf]
    %v179 = vld [vmem:[#allocation5 + $0x104] sm:$0xf]
    %v180 = vld [vmem:[#allocation5 + $0x108] sm:$0xf]
    %v181 = vld [vmem:[#allocation5 + $0x10c] sm:$0xf]
    %v182 = vld [vmem:[#allocation5 + $0x110] sm:$0xf]
    %v183 = vld [vmem:[#allocation5 + $0x114] sm:$0xf]
    %v184 = vld [vmem:[#allocation5 + $0x118] sm:$0xf]
    %v185 = vld [vmem:[#allocation5 + $0x11c] sm:$0xf]
    %v186 = vld [vmem:[#allocation5 + $0x120] sm:$0xf]
    %v187 = vld [vmem:[#allocation5 + $0x124] sm:$0xf]
    %v188 = vld [vmem:[#allocation5 + $0x128] sm:$0xf]
    %v189 = vld [vmem:[#allocation5 + $0x12c] sm:$0xf]
    %v190 = vld [vmem:[#allocation5 + $0x130] sm:$0xf]
    %v191 = vld [vmem:[#allocation5 + $0x134] sm:$0xf]
    %v192 = vld [vmem:[#allocation5 + $0x138] sm:$0xf]
    %v193 = vld [vmem:[#allocation5 + $0x13c] sm:$0xf]
    %v194 = vld [vmem:[#allocation5 + $0x140] sm:$0xf]
    %v195 = vld [vmem:[#allocation5 + $0x144] sm:$0xf]
    %v196 = vld [vmem:[#allocation5 + $0x148] sm:$0xf]
    %v197 = vld [vmem:[#allocation5 + $0x14c] sm:$0xf]
    %v198 = vld [vmem:[#allocation5 + $0x150] sm:$0xf]
    %v199 = vld [vmem:[#allocation5 + $0x154] sm:$0xf]
    %v200 = vld [vmem:[#allocation5 + $0x158] sm:$0xf]
    %v201 = vld [vmem:[#allocation5 + $0x15c] sm:$0xf]
    %v202 = vld [vmem:[#allocation5 + $0x160] sm:$0xf]
    %v203 = vld [vmem:[#allocation5 + $0x164] sm:$0xf]
    %v204 = vld [vmem:[#allocation5 + $0x168] sm:$0xf]
    %v205 = vld [vmem:[#allocation5 + $0x16c] sm:$0xf]
    %v206 = vld [vmem:[#allocation5 + $0x170] sm:$0xf]
    %v207 = vld [vmem:[#allocation5 + $0x174] sm:$0xf]
    %v208 = vld [vmem:[#allocation5 + $0x178] sm:$0xf]
    %v209 = vld [vmem:[#allocation5 + $0x17c] sm:$0xf]
    %v210 = vld [vmem:[#allocation5 + $0x180] sm:$0xf]
    %v211 = vld [vmem:[#allocation5 + $0x184] sm:$0xf]
    %v212 = vld [vmem:[#allocation5 + $0x188] sm:$0xf]
    %v213 = vld [vmem:[#allocation5 + $0x18c] sm:$0xf]
    %v214 = vld [vmem:[#allocation5 + $0x190] sm:$0xf]
    %v215 = vld [vmem:[#allocation5 + $0x194] sm:$0xf]
    %v216 = vld [vmem:[#allocation5 + $0x198] sm:$0xf]
    %v217 = vld [vmem:[#allocation5 + $0x19c] sm:$0xf]
    %v218 = vld [vmem:[#allocation5 + $0x1a0] sm:$0xf]
    %v219 = vld [vmem:[#allocation5 + $0x1a4] sm:$0xf]
    %v220 = vld [vmem:[#allocation5 + $0x1a8] sm:$0xf]
    %v221 = vld [vmem:[#allocation5 + $0x1ac] sm:$0xf]
    %v222 = vld [vmem:[#allocation5 + $0x1b0] sm:$0xf]
    %v223 = vld [vmem:[#allocation5 + $0x1b4] sm:$0xf]
    %v224 = vld [vmem:[#allocation5 + $0x1b8] sm:$0xf]
    %v225 = vld [vmem:[#allocation5 + $0x1bc] sm:$0xf]
    %v226 = vld [vmem:[#allocation5 + $0x1c0] sm:$0xf]
    %v227 = vld [vmem:[#allocation5 + $0x1c4] sm:$0xf]
    %v228 = vld [vmem:[#allocation5 + $0x1c8] sm:$0xf]
    %v229 = vld [vmem:[#allocation5 + $0x1cc] sm:$0xf]
    %v230 = vld [vmem:[#allocation5 + $0x1d0] sm:$0xf]
    %v231 = vld [vmem:[#allocation5 + $0x1d4] sm:$0xf]
    %v232 = vld [vmem:[#allocation5 + $0x1d8] sm:$0xf]
    %v233 = vld [vmem:[#allocation5 + $0x1dc] sm:$0xf]
    %v234 = vld [vmem:[#allocation5 + $0x1e0] sm:$0xf]
    %v235 = vld [vmem:[#allocation5 + $0x1e4] sm:$0xf]
    %v236 = vld [vmem:[#allocation5 + $0x1e8] sm:$0xf]
    %v237 = vld [vmem:[#allocation5 + $0x1ec] sm:$0xf]
    %v238 = vld [vmem:[#allocation5 + $0x1f0] sm:$0xf]
    %v239 = vld [vmem:[#allocation5 + $0x1f4] sm:$0xf]
    %v240 = vld [vmem:[#allocation5 + $0x1f8] sm:$0xf]
    %v241 = vld [vmem:[#allocation5 + $0x1fc] sm:$0xf]
    %v242 = vld [vmem:[%s2] sm:$0x1]
    %v244 = vperm.slane %v242, 0
    %v374 = vunpack.c.l.b16 %v114
    %v375 = vunpack.c.l.b16 %v115
    %v376 = vunpack.c.l.b16 %v116
    %v377 = vunpack.c.l.b16 %v117
    %v378 = vunpack.c.l.b16 %v118
    %v379 = vunpack.c.l.b16 %v119
    %v380 = vunpack.c.l.b16 %v120
    %v381 = vunpack.c.l.b16 %v121
    %v382 = vunpack.c.l.b16 %v122
    %v383 = vunpack.c.l.b16 %v123
    %v384 = vunpack.c.l.b16 %v124
    %v385 = vunpack.c.l.b16 %v125
    %v386 = vunpack.c.l.b16 %v126
    %v387 = vunpack.c.l.b16 %v127
    %v388 = vunpack.c.l.b16 %v128
    %v389 = vunpack.c.l.b16 %v129
    %v390 = vunpack.c.l.b16 %v130
    %v391 = vunpack.c.l.b16 %v131
    %v392 = vunpack.c.l.b16 %v132
    %v393 = vunpack.c.l.b16 %v133
    %v394 = vunpack.c.l.b16 %v134
    %v395 = vunpack.c.l.b16 %v135
    %v396 = vunpack.c.l.b16 %v136
    %v397 = vunpack.c.l.b16 %v137
    %v398 = vunpack.c.l.b16 %v138
    %v399 = vunpack.c.l.b16 %v139
    %v400 = vunpack.c.l.b16 %v140
    %v401 = vunpack.c.l.b16 %v141
    %v402 = vunpack.c.l.b16 %v142
    %v403 = vunpack.c.l.b16 %v143
    %v404 = vunpack.c.l.b16 %v144
    %v405 = vunpack.c.l.b16 %v145
    %v406 = vunpack.c.l.b16 %v146
    %v407 = vunpack.c.l.b16 %v147
    %v408 = vunpack.c.l.b16 %v148
    %v409 = vunpack.c.l.b16 %v149
    %v410 = vunpack.c.l.b16 %v150
    %v411 = vunpack.c.l.b16 %v151
    %v412 = vunpack.c.l.b16 %v152
    %v413 = vunpack.c.l.b16 %v153
    %v414 = vunpack.c.l.b16 %v154
    %v415 = vunpack.c.l.b16 %v155
    %v416 = vunpack.c.l.b16 %v156
    %v417 = vunpack.c.l.b16 %v157
    %v418 = vunpack.c.l.b16 %v158
    %v419 = vunpack.c.l.b16 %v159
    %v420 = vunpack.c.l.b16 %v160
    %v421 = vunpack.c.l.b16 %v161
    %v422 = vunpack.c.l.b16 %v162
    %v423 = vunpack.c.l.b16 %v163
    %v424 = vunpack.c.l.b16 %v164
    %v425 = vunpack.c.l.b16 %v165
    %v426 = vunpack.c.l.b16 %v166
    %v427 = vunpack.c.l.b16 %v167
    %v428 = vunpack.c.l.b16 %v168
    %v429 = vunpack.c.l.b16 %v169
    %v430 = vunpack.c.l.b16 %v170
    %v431 = vunpack.c.l.b16 %v171
    %v432 = vunpack.c.l.b16 %v172
    %v433 = vunpack.c.l.b16 %v173
    %v434 = vunpack.c.l.b16 %v174
    %v435 = vunpack.c.l.b16 %v175
    %v436 = vunpack.c.l.b16 %v176
    %v437 = vunpack.c.l.b16 %v177
    %v438 = vunpack.c.l.b16 %v178
    %v439 = vunpack.c.l.b16 %v179
    %v440 = vunpack.c.l.b16 %v180
    %v441 = vunpack.c.l.b16 %v181
    %v442 = vunpack.c.l.b16 %v182
    %v443 = vunpack.c.l.b16 %v183
    %v444 = vunpack.c.l.b16 %v184
    %v445 = vunpack.c.l.b16 %v185
    %v446 = vunpack.c.l.b16 %v186
    %v447 = vunpack.c.l.b16 %v187
    %v448 = vunpack.c.l.b16 %v188
    %v449 = vunpack.c.l.b16 %v189
    %v450 = vunpack.c.l.b16 %v190
    %v451 = vunpack.c.l.b16 %v191
    %v452 = vunpack.c.l.b16 %v192
    %v453 = vunpack.c.l.b16 %v193
    %v454 = vunpack.c.l.b16 %v194
    %v455 = vunpack.c.l.b16 %v195
    %v456 = vunpack.c.l.b16 %v196
    %v457 = vunpack.c.l.b16 %v197
    %v458 = vunpack.c.l.b16 %v198
    %v459 = vunpack.c.l.b16 %v199
    %v460 = vunpack.c.l.b16 %v200
    %v461 = vunpack.c.l.b16 %v201
    %v462 = vunpack.c.l.b16 %v202
    %v463 = vunpack.c.l.b16 %v203
    %v464 = vunpack.c.l.b16 %v204
    %v465 = vunpack.c.l.b16 %v205
    %v466 = vunpack.c.l.b16 %v206
    %v467 = vunpack.c.l.b16 %v207
    %v468 = vunpack.c.l.b16 %v208
    %v469 = vunpack.c.l.b16 %v209
    %v470 = vunpack.c.l.b16 %v210
    %v471 = vunpack.c.l.b16 %v211
    %v472 = vunpack.c.l.b16 %v212
    %v473 = vunpack.c.l.b16 %v213
    %v474 = vunpack.c.l.b16 %v214
    %v475 = vunpack.c.l.b16 %v215
    %v476 = vunpack.c.l.b16 %v216
    %v477 = vunpack.c.l.b16 %v217
    %v478 = vunpack.c.l.b16 %v218
    %v479 = vunpack.c.l.b16 %v219
    %v480 = vunpack.c.l.b16 %v220
    %v481 = vunpack.c.l.b16 %v221
    %v482 = vunpack.c.l.b16 %v222
    %v483 = vunpack.c.l.b16 %v223
    %v484 = vunpack.c.l.b16 %v224
    %v485 = vunpack.c.l.b16 %v225
    %v486 = vunpack.c.l.b16 %v226
    %v487 = vunpack.c.l.b16 %v227
    %v488 = vunpack.c.l.b16 %v228
    %v489 = vunpack.c.l.b16 %v229
    %v490 = vunpack.c.l.b16 %v230
    %v491 = vunpack.c.l.b16 %v231
    %v492 = vunpack.c.l.b16 %v232
    %v493 = vunpack.c.l.b16 %v233
    %v494 = vunpack.c.l.b16 %v234
    %v495 = vunpack.c.l.b16 %v235
    %v496 = vunpack.c.l.b16 %v236
    %v497 = vunpack.c.l.b16 %v237
    %v498 = vunpack.c.l.b16 %v238
    %v499 = vunpack.c.l.b16 %v239
    %v500 = vunpack.c.l.b16 %v240
    %v501 = vunpack.c.l.b16 %v241
    %v502 = vpack.c.b16 %v375, %v374
    %v503 = vpack.c.b16 %v377, %v376
    %v504 = vpack.c.b16 %v379, %v378
    %v505 = vpack.c.b16 %v381, %v380
    %v506 = vpack.c.b16 %v383, %v382
    %v507 = vpack.c.b16 %v385, %v384
    %v508 = vpack.c.b16 %v387, %v386
    %v509 = vpack.c.b16 %v389, %v388
    %v510 = vpack.c.b16 %v391, %v390
    %v511 = vpack.c.b16 %v393, %v392
    %v512 = vpack.c.b16 %v395, %v394
    %v513 = vpack.c.b16 %v397, %v396
    %v514 = vpack.c.b16 %v399, %v398
    %v515 = vpack.c.b16 %v401, %v400
    %v516 = vpack.c.b16 %v403, %v402
    %v517 = vpack.c.b16 %v405, %v404
    %v518 = vpack.c.b16 %v407, %v406
    %v519 = vpack.c.b16 %v409, %v408
    %v520 = vpack.c.b16 %v411, %v410
    %v521 = vpack.c.b16 %v413, %v412
    %v522 = vpack.c.b16 %v415, %v414
    %v523 = vpack.c.b16 %v417, %v416
    %v524 = vpack.c.b16 %v419, %v418
    %v525 = vpack.c.b16 %v421, %v420
    %v526 = vpack.c.b16 %v423, %v422
    %v527 = vpack.c.b16 %v425, %v424
    %v528 = vpack.c.b16 %v427, %v426
    %v529 = vpack.c.b16 %v429, %v428
    %v530 = vpack.c.b16 %v431, %v430
    %v531 = vpack.c.b16 %v433, %v432
    %v532 = vpack.c.b16 %v435, %v434
    %v533 = vpack.c.b16 %v437, %v436
    %v534 = vpack.c.b16 %v439, %v438
    %v535 = vpack.c.b16 %v441, %v440
    %v536 = vpack.c.b16 %v443, %v442
    %v537 = vpack.c.b16 %v445, %v444
    %v538 = vpack.c.b16 %v447, %v446
    %v539 = vpack.c.b16 %v449, %v448
    %v540 = vpack.c.b16 %v451, %v450
    %v541 = vpack.c.b16 %v453, %v452
    %v542 = vpack.c.b16 %v455, %v454
    %v543 = vpack.c.b16 %v457, %v456
    %v544 = vpack.c.b16 %v459, %v458
    %v545 = vpack.c.b16 %v461, %v460
    %v546 = vpack.c.b16 %v463, %v462
    %v547 = vpack.c.b16 %v465, %v464
    %v548 = vpack.c.b16 %v467, %v466
    %v549 = vpack.c.b16 %v469, %v468
    %v550 = vpack.c.b16 %v471, %v470
    %v551 = vpack.c.b16 %v473, %v472
    %v552 = vpack.c.b16 %v475, %v474
    %v553 = vpack.c.b16 %v477, %v476
    %v554 = vpack.c.b16 %v479, %v478
    %v555 = vpack.c.b16 %v481, %v480
    %v556 = vpack.c.b16 %v483, %v482
    %v557 = vpack.c.b16 %v485, %v484
    %v558 = vpack.c.b16 %v487, %v486
    %v559 = vpack.c.b16 %v489, %v488
    %v560 = vpack.c.b16 %v491, %v490
    %v561 = vpack.c.b16 %v493, %v492
    %v562 = vpack.c.b16 %v495, %v494
    %v563 = vpack.c.b16 %v497, %v496
    %v564 = vpack.c.b16 %v499, %v498
    %v565 = vpack.c.b16 %v501, %v500
    %630 = vmatpush.bf16.msra.mxu0 %v509
    %631 = vmatpush.bf16.msra.mxu0 %v508
    %632 = vmatpush.bf16.msra.mxu0 %v507
    %633 = vmatpush.bf16.msra.mxu0 %v506
    %634 = vmatpush.bf16.msra.mxu0 %v505
    %635 = vmatpush.bf16.msra.mxu0 %v504
    %636 = vmatpush.bf16.msra.mxu0 %v503
    %637 = vmatpush.bf16.msra.mxu0 %v502
    %638 = vmatmul.bf16.gmra.mxu0 %v106
    %v639 = vpop.f32.mrf.mxu0
    %v640 = vadd.f32 %v244, %v639
    %v641 = vpop.f32.mrf.mxu0
    %642 = vdwg.mxu0
    %643 = vmatpush.bf16.msra.mxu0 %v517
    %644 = vmatpush.bf16.msra.mxu0 %v516
    %645 = vmatpush.bf16.msra.mxu0 %v515
    %646 = vmatpush.bf16.msra.mxu0 %v514
    %647 = vmatpush.bf16.msra.mxu0 %v513
    %648 = vmatpush.bf16.msra.mxu0 %v512
    %649 = vmatpush.bf16.msra.mxu0 %v511
    %650 = vmatpush.bf16.msra.mxu0 %v510
    %651 = vmatmul.bf16.gmra.mxu0 %v107
    %v652 = vpop.f32.mrf.mxu0
    %v653 = vadd.f32 %v640, %v652
    %v654 = vpop.f32.mrf.mxu0
    %655 = vdwg.mxu0
    %656 = vmatpush.bf16.msra.mxu0 %v525
    %657 = vmatpush.bf16.msra.mxu0 %v524
    %658 = vmatpush.bf16.msra.mxu0 %v523
    %659 = vmatpush.bf16.msra.mxu0 %v522
    %660 = vmatpush.bf16.msra.mxu0 %v521
    %661 = vmatpush.bf16.msra.mxu0 %v520
    %662 = vmatpush.bf16.msra.mxu0 %v519
    %663 = vmatpush.bf16.msra.mxu0 %v518
    %664 = vmatmul.bf16.gmra.mxu0 %v108
    %v665 = vpop.f32.mrf.mxu0
    %v666 = vadd.f32 %v653, %v665
    %v667 = vpop.f32.mrf.mxu0
    %668 = vdwg.mxu0
    %669 = vmatpush.bf16.msra.mxu0 %v533
    %670 = vmatpush.bf16.msra.mxu0 %v532
    %671 = vmatpush.bf16.msra.mxu0 %v531
    %672 = vmatpush.bf16.msra.mxu0 %v530
    %673 = vmatpush.bf16.msra.mxu0 %v529
    %674 = vmatpush.bf16.msra.mxu0 %v528
    %675 = vmatpush.bf16.msra.mxu0 %v527
    %676 = vmatpush.bf16.msra.mxu0 %v526
    %677 = vmatmul.bf16.gmra.mxu0 %v109
    %v678 = vpop.f32.mrf.mxu0
    %v679 = vadd.f32 %v666, %v678
    %v680 = vpop.f32.mrf.mxu0
    %681 = vdwg.mxu0
    %682 = vmatpush.bf16.msra.mxu0 %v541
    %683 = vmatpush.bf16.msra.mxu0 %v540
    %684 = vmatpush.bf16.msra.mxu0 %v539
    %685 = vmatpush.bf16.msra.mxu0 %v538
    %686 = vmatpush.bf16.msra.mxu0 %v537
    %687 = vmatpush.bf16.msra.mxu0 %v536
    %688 = vmatpush.bf16.msra.mxu0 %v535
    %689 = vmatpush.bf16.msra.mxu0 %v534
    %690 = vmatmul.bf16.gmra.mxu0 %v110
    %v691 = vpop.f32.mrf.mxu0
    %v692 = vadd.f32 %v679, %v691
    %v693 = vpop.f32.mrf.mxu0
    %694 = vdwg.mxu0
    %695 = vmatpush.bf16.msra.mxu0 %v549
    %696 = vmatpush.bf16.msra.mxu0 %v548
    %697 = vmatpush.bf16.msra.mxu0 %v547
    %698 = vmatpush.bf16.msra.mxu0 %v546
    %699 = vmatpush.bf16.msra.mxu0 %v545
    %700 = vmatpush.bf16.msra.mxu0 %v544
    %701 = vmatpush.bf16.msra.mxu0 %v543
    %702 = vmatpush.bf16.msra.mxu0 %v542
    %703 = vmatmul.bf16.gmra.mxu0 %v111
    %v704 = vpop.f32.mrf.mxu0
    %v705 = vadd.f32 %v692, %v704
    %v706 = vpop.f32.mrf.mxu0
    %707 = vdwg.mxu0
    %708 = vmatpush.bf16.msra.mxu0 %v557
    %709 = vmatpush.bf16.msra.mxu0 %v556
    %710 = vmatpush.bf16.msra.mxu0 %v555
    %711 = vmatpush.bf16.msra.mxu0 %v554
    %712 = vmatpush.bf16.msra.mxu0 %v553
    %713 = vmatpush.bf16.msra.mxu0 %v552
    %714 = vmatpush.bf16.msra.mxu0 %v551
    %715 = vmatpush.bf16.msra.mxu0 %v550
    %716 = vmatmul.bf16.gmra.mxu0 %v112
    %v717 = vpop.f32.mrf.mxu0
    %v718 = vadd.f32 %v705, %v717
    %v719 = vpop.f32.mrf.mxu0
    %720 = vdwg.mxu0
    %721 = vmatpush.bf16.msra.mxu0 %v565
    %722 = vmatpush.bf16.msra.mxu0 %v564
    %723 = vmatpush.bf16.msra.mxu0 %v563
    %724 = vmatpush.bf16.msra.mxu0 %v562
    %725 = vmatpush.bf16.msra.mxu0 %v561
    %726 = vmatpush.bf16.msra.mxu0 %v560
    %727 = vmatpush.bf16.msra.mxu0 %v559
    %728 = vmatpush.bf16.msra.mxu0 %v558
    %729 = vmatmul.bf16.gmra.mxu0 %v113
    %v730 = vpop.f32.mrf.mxu0
    %v731 = vadd.f32 %v718, %v730
    %v732 = vpop.f32.mrf.mxu0
    %733 = vdwg.mxu0
    %v734 = vmax.f32 %v731, 0.0
    %v735 = vpack.c.bf16 %v734, %v734
    %v736 = vld [vmem:[%s3] sm:$0xf]
    %v737 = vld [vmem:[%s3 + $0x4] sm:$0xf]
    %v738 = vld [vmem:[%s3 + $0x8] sm:$0xf]
    %v739 = vld [vmem:[%s3 + $0xc] sm:$0xf]
    %v740 = vld [vmem:[%s3 + $0x10] sm:$0xf]
    %v741 = vld [vmem:[%s3 + $0x14] sm:$0xf]
    %v742 = vld [vmem:[%s3 + $0x18] sm:$0xf]
    %v743 = vld [vmem:[%s3 + $0x1c] sm:$0xf]
    %v744 = vld [vmem:[%s3 + $0x20] sm:$0xf]
    %v745 = vld [vmem:[%s3 + $0x24] sm:$0xf]
    %v746 = vld [vmem:[%s3 + $0x28] sm:$0xf]
    %v747 = vld [vmem:[%s3 + $0x2c] sm:$0xf]
    %v748 = vld [vmem:[%s3 + $0x30] sm:$0xf]
    %v749 = vld [vmem:[%s3 + $0x34] sm:$0xf]
    %v750 = vld [vmem:[%s3 + $0x38] sm:$0xf]
    %v751 = vld [vmem:[%s3 + $0x3c] sm:$0xf]
    %v752 = vld [vmem:[%s4] sm:$0x1]
    %v754 = vperm.slane %v752, 0
    %v772 = vunpack.c.l.b16 %v736
    %v773 = vunpack.c.l.b16 %v737
    %v774 = vunpack.c.l.b16 %v738
    %v775 = vunpack.c.l.b16 %v739
    %v776 = vunpack.c.l.b16 %v740
    %v777 = vunpack.c.l.b16 %v741
    %v778 = vunpack.c.l.b16 %v742
    %v779 = vunpack.c.l.b16 %v743
    %v780 = vunpack.c.l.b16 %v744
    %v781 = vunpack.c.l.b16 %v745
    %v782 = vunpack.c.l.b16 %v746
    %v783 = vunpack.c.l.b16 %v747
    %v784 = vunpack.c.l.b16 %v748
    %v785 = vunpack.c.l.b16 %v749
    %v786 = vunpack.c.l.b16 %v750
    %v787 = vunpack.c.l.b16 %v751
    %v788 = vpack.c.b16 %v773, %v772
    %v789 = vpack.c.b16 %v775, %v774
    %v790 = vpack.c.b16 %v777, %v776
    %v791 = vpack.c.b16 %v779, %v778
    %v792 = vpack.c.b16 %v781, %v780
    %v793 = vpack.c.b16 %v783, %v782
    %v794 = vpack.c.b16 %v785, %v784
    %v795 = vpack.c.b16 %v787, %v786
    %804 = vmatpush.bf16.msra.mxu0 %v795
    %805 = vmatpush.bf16.msra.mxu0 %v794
    %806 = vmatpush.bf16.msra.mxu0 %v793
    %807 = vmatpush.bf16.msra.mxu0 %v792
    %808 = vmatpush.bf16.msra.mxu0 %v791
    %809 = vmatpush.bf16.msra.mxu0 %v790
    %810 = vmatpush.bf16.msra.mxu0 %v789
    %811 = vmatpush.bf16.msra.mxu0 %v788
    %812 = vmatmul.bf16.gmra.mxu0 %v735
    %v813 = vpop.f32.mrf.mxu0
    %v814 = vadd.f32 %v754, %v813
    %v815 = vpop.f32.mrf.mxu0
    %816 = vdwg.mxu0
    %v817 = vmax.f32 %v814, 0.0
    %v818 = vpack.c.bf16 %v817, %v817
    %v819 = vld [vmem:[%s5] sm:$0xf]
    %v820 = vld [vmem:[%s5 + $0x4] sm:$0xf]
    %v821 = vld [vmem:[%s5 + $0x8] sm:$0xf]
    %v822 = vld [vmem:[%s5 + $0xc] sm:$0xf]
    %v823 = vld [vmem:[%s5 + $0x10] sm:$0xf]
    %v824 = vld [vmem:[%s5 + $0x14] sm:$0xf]
    %v825 = vld [vmem:[%s5 + $0x18] sm:$0xf]
    %v826 = vld [vmem:[%s5 + $0x1c] sm:$0xf]
    %v827 = vld [vmem:[%s5 + $0x20] sm:$0xf]
    %v828 = vld [vmem:[%s5 + $0x24] sm:$0xf]
    %v829 = vld [vmem:[%s5 + $0x28] sm:$0xf]
    %v830 = vld [vmem:[%s5 + $0x2c] sm:$0xf]
    %v831 = vld [vmem:[%s5 + $0x30] sm:$0xf]
    %v832 = vld [vmem:[%s5 + $0x34] sm:$0xf]
    %v833 = vld [vmem:[%s5 + $0x38] sm:$0xf]
    %v834 = vld [vmem:[%s5 + $0x3c] sm:$0xf]
    %v835 = vld [vmem:[%s6] sm:$0x1]
    %v837 = vperm.slane %v835, 0
    %v855 = vunpack.c.l.b16 %v819
    %v856 = vunpack.c.l.b16 %v820
    %v857 = vunpack.c.l.b16 %v821
    %v858 = vunpack.c.l.b16 %v822
    %v859 = vunpack.c.l.b16 %v823
    %v860 = vunpack.c.l.b16 %v824
    %v861 = vunpack.c.l.b16 %v825
    %v862 = vunpack.c.l.b16 %v826
    %v863 = vunpack.c.l.b16 %v827
    %v864 = vunpack.c.l.b16 %v828
    %v865 = vunpack.c.l.b16 %v829
    %v866 = vunpack.c.l.b16 %v830
    %v867 = vunpack.c.l.b16 %v831
    %v868 = vunpack.c.l.b16 %v832
    %v869 = vunpack.c.l.b16 %v833
    %v870 = vunpack.c.l.b16 %v834
    %v871 = vpack.c.b16 %v856, %v855
    %v872 = vpack.c.b16 %v858, %v857
    %v873 = vpack.c.b16 %v860, %v859
    %v874 = vpack.c.b16 %v862, %v861
    %v875 = vpack.c.b16 %v864, %v863
    %v876 = vpack.c.b16 %v866, %v865
    %v877 = vpack.c.b16 %v868, %v867
    %v878 = vpack.c.b16 %v870, %v869
    %887 = vmatpush.bf16.msra.mxu0 %v878
    %888 = vmatpush.bf16.msra.mxu0 %v877
    %889 = vmatpush.bf16.msra.mxu0 %v876
    %890 = vmatpush.bf16.msra.mxu0 %v875
    %891 = vmatpush.bf16.msra.mxu0 %v874
    %892 = vmatpush.bf16.msra.mxu0 %v873
    %893 = vmatpush.bf16.msra.mxu0 %v872
    %894 = vmatpush.bf16.msra.mxu0 %v871
    %895 = vmatmul.bf16.gmra.mxu0 %v818
    %v896 = vpop.f32.mrf.mxu0
    %v897 = vadd.f32 %v837, %v896
    %v898 = vpop.f32.mrf.mxu0
    %899 = vdwg.mxu0
    %vm900 = vcmask 64512
    %901 = vst.msk [vmem:[#allocation7] sm:$0xff] %vm900, %v897
    // Predicated region
    $region38: #{tpu_custom_call.1} parent=1 // pred_check
      _
    $region39: #{tpu_custom_call.1} parent=1 // pred_check_branch
      %903 = sbr.rel (0) target = $region41
    $region40: #{tpu_custom_call.1} parent=1 // pred_region
      %905 = vsyncadd [#allocation4], 96
      %s906 = sshll.u32 [#allocation7], 4
      %s907 = int_to_ptr.vmem [resolvable:$true] %s906
      %s908 = sshll.u32 %s7, 4
      %s909 = int_to_ptr.hbm [resolvable:$true] %s908
      %914 = dma.vmem_to_hbm [thread:$0]  %s907, 32, %s909, [#allocation4], 32, 32, 2
    $region41: #{tpu_custom_call.1} parent=1 // pred_fallthru
      _
    // Predicated region
    $region42: #{tpu_custom_call.1} parent=1 // pred_check
      _
    $region43: #{tpu_custom_call.1} parent=1 // pred_check_branch
      %916 = sbr.rel (0) target = $region45
    $region44: #{tpu_custom_call.1} parent=1 // pred_region
      %918 = dma.done [#allocation4], 128
    $region45: #{tpu_custom_call.1} parent=1 // pred_fallthru
      _
    %919 = vsyncpa [#allocation3], 1
    %920 = vsyncpa [#allocation6], 1
    %921 = vsyncpa [#allocation4], 1

</llo_original>
